<compile_context>
chip_gen: v7x
topology: tpu7x:2x2x1
jax: 0.10.0
libtpu: 0.0.40
codegen_flags: <defaults>
</compile_context>

<pallas_src>
import jax
import jax.numpy as jnp
from jax.experimental import pallas as pl
from jax.experimental.pallas import tpu as pltpu

HIDDEN = 384          # hidden_size from the module
NUM_A = 3             # num_labels_task_a
NUM_B = 2             # num_labels_task_b
BATCH = 5             # len(sentences)

_LANE = 128           # lane width (fast axis)


def _fused_head_kernel(emb_ref, w_ref, b_ref, logits_ref):
    """Fused dual-head linear layer (single bf16 matmul + single bias add).

    emb_ref:    [B, H]    float32 embeddings (VMEM)
    w_ref:      [H, 128]  bf16 concat([wa, wb], axis=1) zero-padded to 128 lanes
    b_ref:      [1, 128]  f32  concat([ba, bb], axis=1) zero-padded to 128 lanes
    logits_ref: [B, 128]  f32  lane-dense combined logits tile
    """
    logits_ref[...] = (
        jnp.dot(emb_ref[...].astype(jnp.bfloat16), w_ref[...],
                preferred_element_type=jnp.float32)
        + b_ref[...]
    )


@jax.jit
def multitask_forward(embeddings, w_packed, b_packed):
    """embeddings [B,H], pre-packed weights -> (logits_a [B,NA], logits_b [B,NB])."""
    b = embeddings.shape[0]

    # Whole problem (~0.1 MiB) fits in VMEM as one full-array block; no grid.
    logits = pl.pallas_call(
        _fused_head_kernel,
        out_shape=jax.ShapeDtypeStruct((b, _LANE), jnp.float32),
        in_specs=[
            pl.BlockSpec(memory_space=pltpu.MemorySpace.VMEM),  # embeddings
            pl.BlockSpec(memory_space=pltpu.MemorySpace.VMEM),  # fused weight
            pl.BlockSpec(memory_space=pltpu.MemorySpace.VMEM),  # fused bias
        ],
        out_specs=pl.BlockSpec(memory_space=pltpu.MemorySpace.VMEM),
    )(embeddings, w_packed, b_packed)

    # Split the combined lane-dense tile back into the two heads (fused by XLA).
    logits_a = logits[:, :NUM_A]
    logits_b = logits[:, NUM_A:NUM_A + NUM_B]
    return logits_a, logits_b


def init_params(key):
    """Deterministic nn.Linear-style init: U(-1/sqrt(fan_in), 1/sqrt(fan_in))."""
    k1, k2, k3, k4 = jax.random.split(key, 4)
    bound = 1.0 / jnp.sqrt(float(HIDDEN))
    # stored pre-transposed as [H, num_labels]
    wa = jax.random.uniform(k1, (HIDDEN, NUM_A), jnp.float32, -bound, bound)
    ba = jax.random.uniform(k2, (1, NUM_A), jnp.float32, -bound, bound)
    wb = jax.random.uniform(k3, (HIDDEN, NUM_B), jnp.float32, -bound, bound)
    bb = jax.random.uniform(k4, (1, NUM_B), jnp.float32, -bound, bound)
    return wa, ba, wb, bb


def pack_params(wa, ba, wb, bb):
    """One-time packing (hoisted out of the per-call forward path):
    concat the two heads, zero-pad to 128 lanes, cast weights to bf16."""
    n = wa.shape[1] + wb.shape[1]
    w_cat = jnp.concatenate([wa, wb], axis=1)                      # [H, NA+NB]
    b_cat = jnp.concatenate([ba, bb], axis=1)                      # [1, NA+NB]
    w_packed = jnp.pad(w_cat, ((0, 0), (0, _LANE - n))).astype(jnp.bfloat16)
    b_packed = jnp.pad(b_cat, ((0, 0), (0, _LANE - n)))            # stays f32
    return w_packed, b_packed


if __name__ == "__main__":
    key = jax.random.PRNGKey(0)
    k_emb, k_params = jax.random.split(key)

    # TODO(synk): pretrained SentenceTransformer('paraphrase-MiniLM-L6-v2')
    # encoder has no in-script equivalent; synthetic embeddings stand in for
    # encoder.encode(sentences, convert_to_tensor=True).
    embeddings = jax.random.normal(k_emb, (BATCH, HIDDEN), dtype=jnp.float32)

    wa, ba, wb, bb = init_params(k_params)
    w_packed, b_packed = pack_params(wa, ba, wb, bb)   # packed once, not per call
    w_packed, b_packed = jax.block_until_ready((w_packed, b_packed))

    logits_a, logits_b = multitask_forward(embeddings, w_packed, b_packed)
    jax.block_until_ready((logits_a, logits_b))

    # reference check against plain f32 JAX (bf16 weights -> relaxed tolerance)
    ref_a = embeddings @ wa + ba
    ref_b = embeddings @ wb + bb
    assert logits_a.shape == (BATCH, NUM_A)
    assert logits_b.shape == (BATCH, NUM_B)
    assert jnp.allclose(logits_a, ref_a, atol=3e-2, rtol=3e-2)
    assert jnp.allclose(logits_b, ref_b, atol=3e-2, rtol=3e-2)

    print("KERNEL_OK")
</pallas_src>

<mosaic_0001>
module attributes {stable_mosaic.version = 11 : i64} {
  func.func @_fused_head_kernel(%arg0: memref<5x384xf32, #tpu.memory_space<vmem>>, %arg1: memref<384x128xbf16, #tpu.memory_space<vmem>>, %arg2: memref<1x128xf32, #tpu.memory_space<vmem>>, %arg3: memref<5x128xf32, #tpu.memory_space<vmem>>) attributes {dimension_semantics = [], scalar_prefetch = 0 : i64, scratch_operands = 0 : i64, tpu.core_type = #tpu.core_type<tc>} {
    %c0 = arith.constant 0 : index
    %c0_0 = arith.constant 0 : index
    %0 = vector.load %arg0[%c0, %c0_0] : memref<5x384xf32, #tpu.memory_space<vmem>>, vector<5x384xf32>
    %1 = arith.truncf %0 : vector<5x384xf32> to vector<5x384xbf16>
    %c0_1 = arith.constant 0 : index
    %c0_2 = arith.constant 0 : index
    %2 = vector.load %arg1[%c0_1, %c0_2] : memref<384x128xbf16, #tpu.memory_space<vmem>>, vector<384x128xbf16>
    %cst = arith.constant dense<0.000000e+00> : vector<5x128xf32>
    %3 = tpu.matmul %1, %2, %cst {dimension_numbers = #tpu.dot_dimension_numbers<[1], [0], [0], [1], [0, 0, 1, 1], [], []>} : vector<5x384xbf16>, vector<384x128xbf16>, vector<5x128xf32> -> vector<5x128xf32>
    %c0_3 = arith.constant 0 : index
    %c0_4 = arith.constant 0 : index
    %4 = vector.load %arg2[%c0_3, %c0_4] : memref<1x128xf32, #tpu.memory_space<vmem>>, vector<1x128xf32>
    %5 = vector.broadcast %4 : vector<1x128xf32> to vector<5x128xf32>
    %6 = arith.addf %3, %5 : vector<5x128xf32>
    %c0_5 = arith.constant 0 : index
    %c0_6 = arith.constant 0 : index
    %7 = vector.load %arg3[%c0_5, %c0_6] : memref<5x128xf32, #tpu.memory_space<vmem>>, vector<5x128xf32>
    tpu.vector_store %arg3[%c0_5, %c0_6], %6 {strides = array<i32>} : memref<5x128xf32, #tpu.memory_space<vmem>>, vector<5x128xf32>,
    return
  }
}

</mosaic_0001>

<llo_original>
// kernel: multitask_forward.1
$region0: #{multitask_forward.1}
  #allocation0 [shape = 'u32[]', space=smem, size = 0x4, offset = 0x4, fixed_abs, tag = 'smem constant byte address 0x4 - core index']
  #allocation1 [shape = 'u32[144,128]{1,0:T(1,128)}', space=vmem, size = 0x12000, scoped, tag = 'internal scratch']
  %s0 = inlined_call_operand.hbm [shape: f32[5,384], index: 0, kind: input, shape index: {}]
  %s1 = inlined_call_operand.hbm [shape: bf16[384,128], index: 1, kind: input, shape index: {}]
  %s2 = inlined_call_operand.vmem [shape: f32[1,128], index: 2, kind: input, shape index: {}]
  %s3 = inlined_call_operand.vmem [shape: f32[5,128], index: 3, kind: output, shape index: {}]
  %s4 = sld [smem:[#allocation0]]
  $region30: #{multitask_forward.1} parent=0
    _
  %s6 = ssub.s32 1, %s4
  %s7 = scalar_select 0, %s6, %s4
  $region1: #{multitask_forward.1} parent=0
    #allocation2 [shape = 'u8[12288]{0}', space=vmem, size = 0x3000, scoped, tag = 'input window, operand 0, single buffered']
    #allocation3 [shape = 's32[1]{0}', space=sflag, size = 0x4, scoped, tag = 'scoped memory for multitask_forward.1']
    #allocation4 [shape = 'u8[98304]{0}', space=vmem, size = 0x18000, scoped, tag = 'input window, operand 1, single buffered']
    #allocation5 [shape = 's32[1]{0}', space=sflag, size = 0x4, scoped, tag = 'scoped memory for multitask_forward.1']
    %8 = vsyncpa [#allocation3], 0
    %9 = vsyncpa [#allocation5], 0
    // Predicated region
    $region2: #{multitask_forward.1} parent=1 // pred_check
      _
    $region3: #{multitask_forward.1} parent=1 // pred_check_branch
      %11 = sbr.rel (0) target = $region5
    $region4: #{multitask_forward.1} parent=1 // pred_region
      %s13 = ssub.s32 384, 384
      %14 = vsyncadd [#allocation3], %s13
      %s16 = sshll.u32 [#allocation2], 4
      %s17 = int_to_ptr.vmem [resolvable:$true] %s16
      %19 = dma.hbm_to_vmem [thread:$0]  %s0, 384, %s17, [#allocation3]
    $region5: #{multitask_forward.1} parent=1 // pred_fallthru
      _
    // Predicated region
    $region6: #{multitask_forward.1} parent=1 // pred_check
      _
    $region7: #{multitask_forward.1} parent=1 // pred_check_branch
      %21 = sbr.rel (0) target = $region9
    $region8: #{multitask_forward.1} parent=1 // pred_region
      %s23 = ssub.s32 3072, 3072
      %24 = vsyncadd [#allocation5], %s23
      %s25 = sshll.u32 [#allocation4], 4
      %s26 = int_to_ptr.vmem [resolvable:$true] %s25
      %31 = dma.hbm_to_vmem [thread:$0]  %s1, 3072, %s26, [#allocation5], 64, 64, 4
    $region9: #{multitask_forward.1} parent=1 // pred_fallthru
      _
    // Predicated region
    $region10: #{multitask_forward.1} parent=1 // pred_check
      _
    $region11: #{multitask_forward.1} parent=1 // pred_check_branch
      %33 = sbr.rel (0) target = $region13
    $region12: #{multitask_forward.1} parent=1 // pred_region
      _
    $region13: #{multitask_forward.1} parent=1 // pred_fallthru
      _
    // Predicated region
    $region14: #{multitask_forward.1} parent=1 // pred_check
      _
    $region15: #{multitask_forward.1} parent=1 // pred_check_branch
      %35 = sbr.rel (0) target = $region17
    $region16: #{multitask_forward.1} parent=1 // pred_region
      %36 = dma.done [#allocation3], 384
    $region17: #{multitask_forward.1} parent=1 // pred_fallthru
      _
    // Predicated region
    $region18: #{multitask_forward.1} parent=1 // pred_check
      _
    $region19: #{multitask_forward.1} parent=1 // pred_check_branch
      %38 = sbr.rel (0) target = $region21
    $region20: #{multitask_forward.1} parent=1 // pred_region
      %39 = dma.done [#allocation5], 3072
    $region21: #{multitask_forward.1} parent=1 // pred_fallthru
      _
    %v41 = vld [vmem:[#allocation2] sm:$0x1f]
    %v42 = vld [vmem:[#allocation2 + $0x8] sm:$0x1f]
    %v43 = vld [vmem:[#allocation2 + $0x10] sm:$0x1f]
    %v44 = vpack.c.bf16 %v41, %v41
    %v45 = vpack.c.bf16 %v42, %v42
    %v46 = vpack.c.bf16 %v43, %v43
    %v47 = vld [vmem:[#allocation4] sm:$0xf]
    %v48 = vld [vmem:[#allocation4 + $0x4] sm:$0xf]
    %v49 = vld [vmem:[#allocation4 + $0x8] sm:$0xf]
    %v50 = vld [vmem:[#allocation4 + $0xc] sm:$0xf]
    %v51 = vld [vmem:[#allocation4 + $0x10] sm:$0xf]
    %v52 = vld [vmem:[#allocation4 + $0x14] sm:$0xf]
    %v53 = vld [vmem:[#allocation4 + $0x18] sm:$0xf]
    %v54 = vld [vmem:[#allocation4 + $0x1c] sm:$0xf]
    %v55 = vld [vmem:[#allocation4 + $0x20] sm:$0xf]
    %v56 = vld [vmem:[#allocation4 + $0x24] sm:$0xf]
    %v57 = vld [vmem:[#allocation4 + $0x28] sm:$0xf]
    %v58 = vld [vmem:[#allocation4 + $0x2c] sm:$0xf]
    %v59 = vld [vmem:[#allocation4 + $0x30] sm:$0xf]
    %v60 = vld [vmem:[#allocation4 + $0x34] sm:$0xf]
    %v61 = vld [vmem:[#allocation4 + $0x38] sm:$0xf]
    %v62 = vld [vmem:[#allocation4 + $0x3c] sm:$0xf]
    %v63 = vld [vmem:[#allocation4 + $0x40] sm:$0xf]
    %v64 = vld [vmem:[#allocation4 + $0x44] sm:$0xf]
    %v65 = vld [vmem:[#allocation4 + $0x48] sm:$0xf]
    %v66 = vld [vmem:[#allocation4 + $0x4c] sm:$0xf]
    %v67 = vld [vmem:[#allocation4 + $0x50] sm:$0xf]
    %v68 = vld [vmem:[#allocation4 + $0x54] sm:$0xf]
    %v69 = vld [vmem:[#allocation4 + $0x58] sm:$0xf]
    %v70 = vld [vmem:[#allocation4 + $0x5c] sm:$0xf]
    %v71 = vld [vmem:[#allocation4 + $0x60] sm:$0xf]
    %v72 = vld [vmem:[#allocation4 + $0x64] sm:$0xf]
    %v73 = vld [vmem:[#allocation4 + $0x68] sm:$0xf]
    %v74 = vld [vmem:[#allocation4 + $0x6c] sm:$0xf]
    %v75 = vld [vmem:[#allocation4 + $0x70] sm:$0xf]
    %v76 = vld [vmem:[#allocation4 + $0x74] sm:$0xf]
    %v77 = vld [vmem:[#allocation4 + $0x78] sm:$0xf]
    %v78 = vld [vmem:[#allocation4 + $0x7c] sm:$0xf]
    %v79 = vld [vmem:[#allocation4 + $0x80] sm:$0xf]
    %v80 = vld [vmem:[#allocation4 + $0x84] sm:$0xf]
    %v81 = vld [vmem:[#allocation4 + $0x88] sm:$0xf]
    %v82 = vld [vmem:[#allocation4 + $0x8c] sm:$0xf]
    %v83 = vld [vmem:[#allocation4 + $0x90] sm:$0xf]
    %v84 = vld [vmem:[#allocation4 + $0x94] sm:$0xf]
    %v85 = vld [vmem:[#allocation4 + $0x98] sm:$0xf]
    %v86 = vld [vmem:[#allocation4 + $0x9c] sm:$0xf]
    %v87 = vld [vmem:[#allocation4 + $0xa0] sm:$0xf]
    %v88 = vld [vmem:[#allocation4 + $0xa4] sm:$0xf]
    %v89 = vld [vmem:[#allocation4 + $0xa8] sm:$0xf]
    %v90 = vld [vmem:[#allocation4 + $0xac] sm:$0xf]
    %v91 = vld [vmem:[#allocation4 + $0xb0] sm:$0xf]
    %v92 = vld [vmem:[#allocation4 + $0xb4] sm:$0xf]
    %v93 = vld [vmem:[#allocation4 + $0xb8] sm:$0xf]
    %v94 = vld [vmem:[#allocation4 + $0xbc] sm:$0xf]
    %v95 = vld [vmem:[%s2] sm:$0x1]
    %v97 = vlaneseq
    %v98 = vshrl.u32 %v97, 7
    %v99 = vsub.s32 0, %v98
    %v100 = vrot.slane %v95, %v99
    %v150 = vunpack.c.l.b16 %v47
    %v151 = vunpack.c.l.b16 %v48
    %v152 = vunpack.c.l.b16 %v49
    %v153 = vunpack.c.l.b16 %v50
    %v154 = vunpack.c.l.b16 %v51
    %v155 = vunpack.c.l.b16 %v52
    %v156 = vunpack.c.l.b16 %v53
    %v157 = vunpack.c.l.b16 %v54
    %v158 = vunpack.c.l.b16 %v55
    %v159 = vunpack.c.l.b16 %v56
    %v160 = vunpack.c.l.b16 %v57
    %v161 = vunpack.c.l.b16 %v58
    %v162 = vunpack.c.l.b16 %v59
    %v163 = vunpack.c.l.b16 %v60
    %v164 = vunpack.c.l.b16 %v61
    %v165 = vunpack.c.l.b16 %v62
    %v166 = vunpack.c.l.b16 %v63
    %v167 = vunpack.c.l.b16 %v64
    %v168 = vunpack.c.l.b16 %v65
    %v169 = vunpack.c.l.b16 %v66
    %v170 = vunpack.c.l.b16 %v67
    %v171 = vunpack.c.l.b16 %v68
    %v172 = vunpack.c.l.b16 %v69
    %v173 = vunpack.c.l.b16 %v70
    %v174 = vunpack.c.l.b16 %v71
    %v175 = vunpack.c.l.b16 %v72
    %v176 = vunpack.c.l.b16 %v73
    %v177 = vunpack.c.l.b16 %v74
    %v178 = vunpack.c.l.b16 %v75
    %v179 = vunpack.c.l.b16 %v76
    %v180 = vunpack.c.l.b16 %v77
    %v181 = vunpack.c.l.b16 %v78
    %v182 = vunpack.c.l.b16 %v79
    %v183 = vunpack.c.l.b16 %v80
    %v184 = vunpack.c.l.b16 %v81
    %v185 = vunpack.c.l.b16 %v82
    %v186 = vunpack.c.l.b16 %v83
    %v187 = vunpack.c.l.b16 %v84
    %v188 = vunpack.c.l.b16 %v85
    %v189 = vunpack.c.l.b16 %v86
    %v190 = vunpack.c.l.b16 %v87
    %v191 = vunpack.c.l.b16 %v88
    %v192 = vunpack.c.l.b16 %v89
    %v193 = vunpack.c.l.b16 %v90
    %v194 = vunpack.c.l.b16 %v91
    %v195 = vunpack.c.l.b16 %v92
    %v196 = vunpack.c.l.b16 %v93
    %v197 = vunpack.c.l.b16 %v94
    %v198 = vpack.c.b16 %v151, %v150
    %v199 = vpack.c.b16 %v153, %v152
    %v200 = vpack.c.b16 %v155, %v154
    %v201 = vpack.c.b16 %v157, %v156
    %v202 = vpack.c.b16 %v159, %v158
    %v203 = vpack.c.b16 %v161, %v160
    %v204 = vpack.c.b16 %v163, %v162
    %v205 = vpack.c.b16 %v165, %v164
    %v206 = vpack.c.b16 %v167, %v166
    %v207 = vpack.c.b16 %v169, %v168
    %v208 = vpack.c.b16 %v171, %v170
    %v209 = vpack.c.b16 %v173, %v172
    %v210 = vpack.c.b16 %v175, %v174
    %v211 = vpack.c.b16 %v177, %v176
    %v212 = vpack.c.b16 %v179, %v178
    %v213 = vpack.c.b16 %v181, %v180
    %v214 = vpack.c.b16 %v183, %v182
    %v215 = vpack.c.b16 %v185, %v184
    %v216 = vpack.c.b16 %v187, %v186
    %v217 = vpack.c.b16 %v189, %v188
    %v218 = vpack.c.b16 %v191, %v190
    %v219 = vpack.c.b16 %v193, %v192
    %v220 = vpack.c.b16 %v195, %v194
    %v221 = vpack.c.b16 %v197, %v196
    %246 = vmatprep.subr.bf16.mxu0 0
    %247 = vmatpush1.bf16.msra.mxu0 %v198
    %248 = vmatprep.subr.bf16.mxu0 0
    %249 = vmatpush1.bf16.msra.mxu0 %v199
    %250 = vmatprep.subr.bf16.mxu0 0
    %251 = vmatpush1.bf16.msra.mxu0 %v200
    %252 = vmatprep.subr.bf16.mxu0 0
    %253 = vmatpush1.bf16.msra.mxu0 %v201
    %254 = vmatprep.subr.bf16.mxu0 0
    %255 = vmatpush1.bf16.msra.mxu0 %v202
    %256 = vmatprep.subr.bf16.mxu0 0
    %257 = vmatpush1.bf16.msra.mxu0 %v203
    %258 = vmatprep.subr.bf16.mxu0 0
    %259 = vmatpush1.bf16.msra.mxu0 %v204
    %260 = vmatprep.subr.bf16.mxu0 0
    %261 = vmatpush1.bf16.msra.mxu0 %v205
    %262 = vmatprep.subr.bf16.mxu0 0
    %263 = vmatpush1.bf16.msra.mxu0 %v206
    %264 = vmatprep.subr.bf16.mxu0 0
    %265 = vmatpush1.bf16.msra.mxu0 %v207
    %266 = vmatprep.subr.bf16.mxu0 0
    %267 = vmatpush1.bf16.msra.mxu0 %v208
    %268 = vmatprep.subr.bf16.mxu0 0
    %269 = vmatpush1.bf16.msra.mxu0 %v209
    %270 = vmatprep.subr.bf16.mxu0 0
    %271 = vmatpush1.bf16.msra.mxu0 %v210
    %272 = vmatprep.subr.bf16.mxu0 0
    %273 = vmatpush1.bf16.msra.mxu0 %v211
    %274 = vmatprep.subr.bf16.mxu0 0
    %275 = vmatpush1.bf16.msra.mxu0 %v212
    %276 = vmatprep.subr.bf16.mxu0 0
    %277 = vmatpush1.bf16.msra.mxu0 %v213
    %278 = vmatprep.mubr.bf16.mxu0 %v45
    %279 = vmatmul.mubr.bf16.gmra.mrb[0].mxu0 %v44
    %v280 = vpop.f32.mrb[0].mxu0
    %v281 = vadd.f32 %v100, %v280
    %v282 = vpop.f32.mrb[0].mxu0
    %v283 = vpop.f32.mrb[0].mxu0
    %v284 = vpop.f32.mrb[0].mxu0
    %285 = vdwg.mxu0
    %286 = vmatprep.subr.bf16.mxu0 0
    %287 = vmatpush1.bf16.msra.mxu0 %v214
    %288 = vmatprep.subr.bf16.mxu0 0
    %289 = vmatpush1.bf16.msra.mxu0 %v215
    %290 = vmatprep.subr.bf16.mxu0 0
    %291 = vmatpush1.bf16.msra.mxu0 %v216
    %292 = vmatprep.subr.bf16.mxu0 0
    %293 = vmatpush1.bf16.msra.mxu0 %v217
    %294 = vmatprep.subr.bf16.mxu0 0
    %295 = vmatpush1.bf16.msra.mxu0 %v218
    %296 = vmatprep.subr.bf16.mxu0 0
    %297 = vmatpush1.bf16.msra.mxu0 %v219
    %298 = vmatprep.subr.bf16.mxu0 0
    %299 = vmatpush1.bf16.msra.mxu0 %v220
    %300 = vmatprep.subr.bf16.mxu0 0
    %301 = vmatpush1.bf16.msra.mxu0 %v221
    %302 = vmatprep.subr.bf16.mxu0 0
    %303 = vmatpush1.bf16.msra.mxu0 0
    %304 = vmatprep.subr.bf16.mxu0 0
    %305 = vmatpush1.bf16.msra.mxu0 0
    %306 = vmatprep.subr.bf16.mxu0 0
    %307 = vmatpush1.bf16.msra.mxu0 0
    %308 = vmatprep.subr.bf16.mxu0 0
    %309 = vmatpush1.bf16.msra.mxu0 0
    %310 = vmatprep.subr.bf16.mxu0 0
    %311 = vmatpush1.bf16.msra.mxu0 0
    %312 = vmatprep.subr.bf16.mxu0 0
    %313 = vmatpush1.bf16.msra.mxu0 0
    %314 = vmatprep.subr.bf16.mxu0 0
    %315 = vmatpush1.bf16.msra.mxu0 0
    %316 = vmatprep.subr.bf16.mxu0 0
    %317 = vmatpush1.bf16.msra.mxu0 0
    %318 = vmatprep.mubr.bf16.mxu0 0
    %319 = vmatmul.mubr.bf16.gmra.mrb[0].mxu0 %v46
    %v320 = vpop.f32.mrb[0].mxu0
    %v321 = vadd.f32 %v281, %v320
    %v322 = vpop.f32.mrb[0].mxu0
    %v323 = vpop.f32.mrb[0].mxu0
    %v324 = vpop.f32.mrb[0].mxu0
    %325 = vdwg.mxu0
    %326 = vst [vmem:[%s3] sm:$0x1f] %v321
    // Predicated region
    $region22: #{multitask_forward.1} parent=1 // pred_check
      _
    $region23: #{multitask_forward.1} parent=1 // pred_check_branch
      %328 = sbr.rel (0) target = $region25
    $region24: #{multitask_forward.1} parent=1 // pred_region
      _
    $region25: #{multitask_forward.1} parent=1 // pred_fallthru
      _
    // Predicated region
    $region26: #{multitask_forward.1} parent=1 // pred_check
      _
    $region27: #{multitask_forward.1} parent=1 // pred_check_branch
      %330 = sbr.rel (0) target = $region29
    $region28: #{multitask_forward.1} parent=1 // pred_region
      _
    $region29: #{multitask_forward.1} parent=1 // pred_fallthru
      _
    %331 = vsyncpa [#allocation3], 1
    %332 = vsyncpa [#allocation5], 1

</llo_original>
